<compile_context>
chip_gen: v5e
topology: v5e:2x2
jax: 0.10.0
libtpu: 0.0.40
codegen_flags: <defaults>
</compile_context>

<pallas_src>
import functools

import jax
import jax.numpy as jnp
from jax.experimental import pallas as pl
from jax.experimental.pallas import tpu as pltpu


def _gap_kernel(x_ref, o_ref, *, inv_hw):
    # x_ref: (BN, C, H*W) VMEM tile; o_ref: (BN, C)
    x = x_ref[...].astype(jnp.float32)              # f32 accumulation
    o_ref[...] = (jnp.sum(x, axis=-1) * inv_hw).astype(o_ref.dtype)


def _choose_bn(n, row_bytes, target_bytes=4 << 20):
    """Pick batch rows per grid step: ~4 MiB input tiles, BN % 8 == 0 or BN == N."""
    bn = max(1, target_bytes // max(1, row_bytes))
    if bn >= n:
        # Whole batch fits one tile.  If the batch is big enough, split into
        # >=2 grid steps so v7x's two TensorCores both get work.
        if n >= 16:
            half = (n + 1) // 2
            return max(8, ((half + 7) // 8) * 8)
        return n
    # Round down to a multiple of 8 -> sublane-aligned (BN, C) output blocks
    # (unmasked, dense stores).  bn < n here, so the grid has >= 2 steps.
    return max(8, (bn // 8) * 8)


def head_forward(x, layer_num, block_num, tag="clean", *, min_pallas_elems=0):
    """Pallas implementation of Head.forward.

    x: (N, C, H, W) float (NCHW, as in PyTorch).
    Returns: (N, C)  (= Flatten(AdaptiveAvgPool2d((1,1))(x))).
    """
    # TODO(synk): per-block modules (ResNet BasicBlock/Bottleneck) are injected
    # from outside Head.__init__ and are not defined in this module; iterated
    # here as identity passes to preserve the loop structure.
    for i in range(layer_num):
        for j in range(block_num[i]):
            x = x  # m(x, tag) — external block, identity stand-in

    N, C, H, W = x.shape
    HW = H * W

    # Tiny-problem fallback: pallas_call launch + DMA setup would exceed the
    # reduction cost; XLA's fused reduce is already at roofline there.
    if N * C * HW < min_pallas_elems:
        return jnp.mean(x, axis=(2, 3))

    x_flat = x.reshape(N, C, HW)
    itemsize = jnp.dtype(x.dtype).itemsize
    bn = _choose_bn(N, C * HW * itemsize)
    grid_n = pl.cdiv(N, bn)

    # Memory-bound hint for the XLA scheduler.
    cost = pl.CostEstimate(
        flops=N * C * HW,
        transcendentals=0,
        bytes_accessed=N * C * HW * itemsize + N * C * itemsize,
    )

    kernel = functools.partial(_gap_kernel, inv_hw=1.0 / HW)

    out = pl.pallas_call(
        kernel,
        out_shape=jax.ShapeDtypeStruct((N, C), x.dtype),
        grid_spec=pltpu.PrefetchScalarGridSpec(
            num_scalar_prefetch=0,
            grid=(grid_n,),
            # Block covers full C and full H*W (satisfies the (8,128) rule by
            # matching full array dims), batched over BN rows of N.
            in_specs=[pl.BlockSpec((bn, C, HW), lambda n: (n, 0, 0))],
            out_specs=pl.BlockSpec((bn, C), lambda n: (n, 0)),
        ),
        compiler_params=pltpu.CompilerParams(
            dimension_semantics=("parallel",),
        ),
        cost_estimate=cost,
    )(x_flat)
    return out


if __name__ == "__main__":
    key = jax.random.PRNGKey(0)

    # Small shapes consistent with the module's NCHW conv-feature input.
    N, C, H, W = 2, 4, 16, 16
    layer_num = 2          # len(layers)
    block_num = [2, 2]     # blocks per layer
    num_classes = 10

    kx, kw, kb = jax.random.split(key, 3)
    x = jax.random.normal(kx, (N, C, H, W), dtype=jnp.float32)

    # Deterministic fc parameters (nn.Linear(512*expansion, num_classes)).
    # Mirrors Head.__init__, but — exactly like the PyTorch module — fc is NOT
    # applied in forward(), so these are unused in the hot path.
    expansion = 1
    fc_w = jax.random.normal(kw, (num_classes, 512 * expansion), dtype=jnp.float32) * 0.01
    fc_b = jnp.zeros((num_classes,), dtype=jnp.float32)

    # min_pallas_elems=0 forces the Pallas path even at this tiny test shape.
    y = head_forward(x, layer_num, block_num, tag="clean", min_pallas_elems=0)
    y = jax.block_until_ready(y)

    # Correctness check against plain-JAX reference of the same forward.
    ref = jnp.mean(x, axis=(2, 3))  # AdaptiveAvgPool2d((1,1)) + Flatten
    assert y.shape == (N, C)
    assert jnp.allclose(y, ref, atol=1e-5, rtol=1e-5)

    print("KERNEL_OK")
</pallas_src>

<mosaic_0001>
module attributes {stable_mosaic.version = 11 : i64} {
  func.func @_gap_kernel(%arg0: i32, %arg1: memref<2x4x256xf32, #tpu.memory_space<vmem>>, %arg2: memref<2x4xf32, #tpu.memory_space<vmem>>) attributes {dimension_semantics = [#tpu.dimension_semantics<parallel>], iteration_bounds = array<i64: 1>, scalar_prefetch = 0 : i64, scratch_operands = 0 : i64, tpu.core_type = #tpu.core_type<tc>, window_params = [{transform_indices = @transform_0, window_bounds = array<i64: 2, 4, 256>}, {transform_indices = @transform_1, window_bounds = array<i64: 2, 4>}]} {
    %c0 = arith.constant 0 : index
    %c0_0 = arith.constant 0 : index
    %c0_1 = arith.constant 0 : index
    %0 = vector.load %arg1[%c0, %c0_0, %c0_1] : memref<2x4x256xf32, #tpu.memory_space<vmem>>, vector<2x4x256xf32>
    %cst = arith.constant dense<0.000000e+00> : vector<2x4xf32>
    %1 = vector.multi_reduction <add>, %0, %cst [2] : vector<2x4x256xf32> to vector<2x4xf32>
    %cst_2 = arith.constant 3.906250e-03 : f32
    %2 = vector.broadcast %cst_2 : f32 to vector<2x4xf32>
    %3 = arith.mulf %1, %2 : vector<2x4xf32>
    %c0_3 = arith.constant 0 : index
    %c0_4 = arith.constant 0 : index
    %4 = vector.load %arg2[%c0_3, %c0_4] : memref<2x4xf32, #tpu.memory_space<vmem>>, vector<2x4xf32>
    tpu.vector_store %arg2[%c0_3, %c0_4], %3 {strides = array<i32>} : memref<2x4xf32, #tpu.memory_space<vmem>>, vector<2x4xf32>,
    return
  }
  func.func @transform_0(%arg0: i32) -> (i32, i32, i32) {
    %c0_i32 = arith.constant 0 : i32
    %c0_i32_0 = arith.constant 0 : i32
    %c0_i32_1 = arith.constant 0 : i32
    return %arg0, %c0_i32, %c0_i32_0 : i32, i32, i32
  }
  func.func @transform_1(%arg0: i32) -> (i32, i32) {
    %c0_i32 = arith.constant 0 : i32
    %c0_i32_0 = arith.constant 0 : i32
    return %arg0, %c0_i32 : i32, i32
  }
}

</mosaic_0001>

<llo_original>
// kernel: tpu_custom_call.1
$region0: #{tpu_custom_call.1}
  #allocation0 [shape = 'u32[]', space=smem, size = 0x4, offset = 0x4, fixed_abs, tag = 'smem constant byte address 0x4 - core index']
  #allocation1 [shape = 'u32[72,128]{1,0:T(1,128)}', space=vmem, size = 0x9000, scoped, tag = 'internal scratch']
  %s0 = inlined_call_operand.hbm [shape: f32[2,4,256], index: 0, kind: input, shape index: {}]
  %s1 = inlined_call_operand.hbm [shape: f32[2,4], index: 1, kind: output, shape index: {}]
  %s2 = sld [smem:[#allocation0]]
  $region18: #{tpu_custom_call.1} parent=0
    _
  %s4 = ssub.s32 1, %s2
  %s5 = scalar_select 0, %s4, %s2
  $region1: #{tpu_custom_call.1} parent=0
    #allocation2 [shape = 'u8[8192]{0}', space=vmem, size = 0x2000, scoped, tag = 'input window, operand 0, single buffered']
    #allocation3 [shape = 's32[1]{0}', space=sflag, size = 0x4, scoped, tag = 'scoped memory for tpu_custom_call.1']
    #allocation4 [shape = 's32[1]{0}', space=sflag, size = 0x4, scoped, tag = 'scoped memory for tpu_custom_call.1']
    #allocation5 [shape = 'u8[1024]{0}', space=vmem, size = 0x400, scoped, tag = 'output window, operand 0, single buffered']
    %6 = vsyncpa [#allocation3], 0
    %7 = vsyncpa [#allocation4], 0
    // Predicated region
    $region2: #{tpu_custom_call.1} parent=1 // pred_check
      _
    $region3: #{tpu_custom_call.1} parent=1 // pred_check_branch
      %9 = sbr.rel (0) target = $region5
    $region4: #{tpu_custom_call.1} parent=1 // pred_region
      %11 = vsyncadd [#allocation3], 0
      %s12 = sshll.u32 %s0, 4
      %s13 = int_to_ptr.hbm [resolvable:$true] %s12
      %s14 = sshll.u32 [#allocation2], 4
      %s15 = int_to_ptr.vmem [resolvable:$true] %s14
      %20 = dma.hbm_to_vmem [thread:$0]  %s13, 256, %s15, [#allocation3], 128, 128, 8
    $region5: #{tpu_custom_call.1} parent=1 // pred_fallthru
      _
    // Predicated region
    $region6: #{tpu_custom_call.1} parent=1 // pred_check
      _
    $region7: #{tpu_custom_call.1} parent=1 // pred_check_branch
      %22 = sbr.rel (0) target = $region9
    $region8: #{tpu_custom_call.1} parent=1 // pred_region
      %24 = dma.done [#allocation3], 256
    $region9: #{tpu_custom_call.1} parent=1 // pred_fallthru
      _
    %v25 = vld [vmem:[#allocation2] sm:$0xff]
    %v26 = vld [vmem:[#allocation2 + $0x8] sm:$0xff]
    %29 = vst [vmem:[#allocation1] ss:$2 sm:$0xff] %v25
    %v30 = vld.sshfl [vmem:[#allocation1] sm:$0xff pattern:$0x75316420]
    %v31 = vld.sshfl [vmem:[#allocation1 + $0x8] sm:$0xff pattern:$0x75316420]
    %s32 = scalar_lea.vmem [#allocation1], 16
    %33 = vst [vmem:[%s32] ss:$2 sm:$0xff] %v26
    %v34 = vld.sshfl [vmem:[#allocation1 + $0x10] sm:$0xff pattern:$0x75316420]
    %v35 = vld.sshfl [vmem:[#allocation1 + $0x18] sm:$0xff pattern:$0x75316420]
    %vm40 = vcmask 1043456
    %v41 = vsel %vm40, %v30, 0.0
    %v42 = vsel %vm40, %v31, 0.0
    %v43 = vadd.f32 %v41, %v42
    %44 = vadd.xlane.f32.xlu0 %v43
    %v45 = vpop.xlane.xlu0 %44
    %v46 = vsel %vm40, %v34, 0.0
    %v47 = vsel %vm40, %v35, 0.0
    %v48 = vadd.f32 %v46, %v47
    %49 = vadd.xlane.f32.xlu0 %v48
    %v50 = vpop.xlane.xlu0 %49
    %v51 = vmul.f32 %v45, 0.00390625
    %v52 = vmul.f32 %v50, 0.00390625
    %v55 = vlaneseq
    %v56 = vand.u32 %v55, 127
    %v57 = vperm.slane %v51, %v56
    %v58 = vperm.slane %v52, %v56
    %vm59 = vcmask 1041409
    %v60 = vsel %vm59, %v58, %v57
    %vm62 = vcmask 25600
    %63 = vst.msk [vmem:[#allocation5] sm:$0x3] %vm62, %v60
    // Predicated region
    $region10: #{tpu_custom_call.1} parent=1 // pred_check
      _
    $region11: #{tpu_custom_call.1} parent=1 // pred_check_branch
      %65 = sbr.rel (0) target = $region13
    $region12: #{tpu_custom_call.1} parent=1 // pred_region
      %67 = vsyncadd [#allocation4], 0
      %s69 = sshll.u32 [#allocation5], 4
      %s70 = int_to_ptr.vmem [resolvable:$true] %s69
      %s71 = sshll.u32 %s1, 4
      %s72 = int_to_ptr.hbm [resolvable:$true] %s71
      %74 = dma.vmem_to_hbm [thread:$0]  %s70, 32, %s72, [#allocation4]
    $region13: #{tpu_custom_call.1} parent=1 // pred_fallthru
      _
    // Predicated region
    $region14: #{tpu_custom_call.1} parent=1 // pred_check
      _
    $region15: #{tpu_custom_call.1} parent=1 // pred_check_branch
      %76 = sbr.rel (0) target = $region17
    $region16: #{tpu_custom_call.1} parent=1 // pred_region
      %78 = dma.done [#allocation4], 32
    $region17: #{tpu_custom_call.1} parent=1 // pred_fallthru
      _
    %79 = vsyncpa [#allocation3], 1
    %80 = vsyncpa [#allocation4], 1

</llo_original>
